<compile_context>
chip_gen: v7x
topology: tpu7x:2x2x1
jax: 0.10.0
libtpu: 0.0.40
codegen_flags: <defaults>
</compile_context>

<pallas_src>
import jax
import jax.numpy as jnp
from jax.experimental import pallas as pl
from jax.experimental.pallas import tpu as pltpu


def _round_up(x, m):
    return ((x + m - 1) // m) * m


def _patch_embed_kernel(x_ref, w_ref, b_ref, o_ref):
    # One (TM, K) x (K, E) MXU matmul per grid step, f32 accumulation, + bias.
    acc = jnp.dot(x_ref[...], w_ref[...], preferred_element_type=jnp.float32)
    o_ref[...] = (acc + b_ref[...].astype(jnp.float32)).astype(o_ref.dtype)


def patch_embed_conv(x, weight, bias, stride, *, tm=256, compute_dtype=None):
    """General strided (possibly overlapping) Conv2d as im2col + Pallas GEMM.

    x:      (B, C, H, W)          NCHW (PyTorch convention)
    weight: (E, C, kh, kw)        nn.Conv2d weight layout
    bias:   (E,)
    stride: (sh, sw)              may be < kernel (overlapping patches, AST case)
    returns (B, num_patches, E) == Conv2d(...)(x).flatten(2).transpose(1,2)
    """
    B, C, H, W = x.shape
    E, _, kh, kw = weight.shape
    sh, sw = stride
    gh = (H - kh) // sh + 1
    gw = (W - kw) // sw + 1
    num_patches = gh * gw
    K = C * kh * kw
    M = B * num_patches
    out_dtype = x.dtype

    # ---- layout glue (plain JAX): im2col with overlap, (C, kh, kw) flatten order ----
    # TODO(synk): fuse this gather into the pallas_call input pipeline (manual DMA
    # per kernel-row offset) to avoid materializing the ~(kh*kw)/(sh*sw)x slab in HBM.
    row_idx = (jnp.arange(gh) * sh)[:, None] + jnp.arange(kh)[None, :]   # (gh, kh)
    col_idx = (jnp.arange(gw) * sw)[:, None] + jnp.arange(kw)[None, :]   # (gw, kw)
    xp = x[:, :, row_idx, :]                       # (B, C, gh, kh, W)
    xp = xp[:, :, :, :, col_idx]                   # (B, C, gh, kh, gw, kw)
    xp = jnp.transpose(xp, (0, 2, 4, 1, 3, 5)).reshape(M, K)   # (M, K)

    w2d = weight.reshape(E, K).T                   # (K, E), matches (C,kh,kw) order
    b2d = bias.reshape(1, E)

    if compute_dtype is not None:                  # e.g. bf16 operands, f32 accumulate
        xp = xp.astype(compute_dtype)
        w2d = w2d.astype(compute_dtype)

    # ---- pad to TPU-friendly shapes: lane-dense E, MXU-aligned K, TM-aligned M ----
    tm = max(8, _round_up(min(tm, _round_up(M, 8)), 8))
    M_pad = _round_up(M, tm)
    K_pad = _round_up(K, 128)
    E_pad = _round_up(E, 128)
    xp = jnp.pad(xp, ((0, M_pad - M), (0, K_pad - K)))
    w2d = jnp.pad(w2d, ((0, K_pad - K), (0, E_pad - E)))
    b2d = jnp.pad(b2d, ((0, 0), (0, E_pad - E)))

    cost = pl.CostEstimate(
        flops=2 * M_pad * K_pad * E_pad,
        transcendentals=0,
        bytes_accessed=(xp.size * xp.dtype.itemsize
                        + w2d.size * w2d.dtype.itemsize
                        + M_pad * E_pad * jnp.dtype(out_dtype).itemsize),
    )

    out2d = pl.pallas_call(
        _patch_embed_kernel,
        out_shape=jax.ShapeDtypeStruct((M_pad, E_pad), out_dtype),
        grid=(M_pad // tm,),
        in_specs=[
            pl.BlockSpec((tm, K_pad), lambda i: (i, 0)),      # X rows: streamed
            pl.BlockSpec((K_pad, E_pad), lambda i: (0, 0)),   # W: resident
            pl.BlockSpec((1, E_pad), lambda i: (0, 0)),       # bias: resident
        ],
        out_specs=pl.BlockSpec((tm, E_pad), lambda i: (i, 0)),
        compiler_params=pltpu.CompilerParams(
            dimension_semantics=("parallel",)),               # megacore on v7x
        cost_estimate=cost,
    )(xp, w2d, b2d)

    return out2d[:M, :E].reshape(B, num_patches, E)


def ast_patch_embed(spectrogram, weight, bias, stride, *, tm=256, compute_dtype=None):
    """Mirrors the start of ASTModel.forward:
    (B, time, freq) -> unsqueeze(1) -> transpose(2,3) -> patch_embed
    -> (B, num_patches, embed_dim)."""
    x = spectrogram[:, None, :, :]                 # (B, 1, T, F)
    x = jnp.transpose(x, (0, 1, 3, 2))             # (B, 1, F, T)  (NCHW)
    return patch_embed_conv(x, weight, bias, stride, tm=tm, compute_dtype=compute_dtype)


def reference_patch_embed(x, weight, bias, stride):
    """Pure-JAX reference: the exact strided conv the PyTorch module performs."""
    sh, sw = stride
    y = jax.lax.conv_general_dilated(
        x, weight, window_strides=(sh, sw), padding="VALID",
        dimension_numbers=("NCHW", "OIHW", "NCHW"),
    ) + bias.reshape(1, -1, 1, 1)
    B, E, gh, gw = y.shape
    return jnp.transpose(y.reshape(B, E, gh * gw), (0, 2, 1))


if __name__ == "__main__":
    # Small AST-consistent shapes: spectrogram (B=2, time=48, freq=32),
    # in_chans=1, kernel 16x16, OVERLAPPING stride (10, 10) (AST fstride=tstride=10),
    # embed_dim=32 (padded to 128 lanes inside the wrapper).
    B, T, F = 2, 48, 32
    kernel = (16, 16)
    stride = (10, 10)
    E = 32

    key = jax.random.PRNGKey(0)
    kx, kw, kb = jax.random.split(key, 3)
    spec = jax.random.normal(kx, (B, T, F), dtype=jnp.float32)
    weight = jax.random.normal(kw, (E, 1, kernel[0], kernel[1]), dtype=jnp.float32) * 0.02
    bias = jax.random.normal(kb, (E,), dtype=jnp.float32) * 0.01

    # tm=8 so even these tiny test shapes exercise a multi-step, pipelined grid.
    out = ast_patch_embed(spec, weight, bias, stride, tm=8)
    out = jax.block_until_ready(out)

    x_nchw = jnp.transpose(spec[:, None, :, :], (0, 1, 3, 2))
    ref = reference_patch_embed(x_nchw, weight, bias, stride)

    gh = (F - kernel[0]) // stride[0] + 1
    gw = (T - kernel[1]) // stride[1] + 1
    assert out.shape == (B, gh * gw, E), out.shape
    err = float(jnp.max(jnp.abs(out - ref)))
    assert jnp.allclose(out, ref, atol=1e-3, rtol=1e-3), err

    print("KERNEL_OK")
</pallas_src>

<mosaic_0001>
module attributes {stable_mosaic.version = 11 : i64} {
  func.func @_patch_embed_kernel(%arg0: i32, %arg1: memref<8x256xf32, #tpu.memory_space<vmem>>, %arg2: memref<256x128xf32, #tpu.memory_space<vmem>>, %arg3: memref<1x128xf32, #tpu.memory_space<vmem>>, %arg4: memref<8x128xf32, #tpu.memory_space<vmem>>) attributes {dimension_semantics = [#tpu.dimension_semantics<parallel>], iteration_bounds = array<i64: 2>, scalar_prefetch = 0 : i64, scratch_operands = 0 : i64, tpu.core_type = #tpu.core_type<tc>, window_params = [{transform_indices = @transform_0, window_bounds = array<i64: 8, 256>}, {pipeline_mode = #tpu.pipeline_mode<synchronous>, transform_indices = @transform_1, window_bounds = array<i64: 256, 128>}, {pipeline_mode = #tpu.pipeline_mode<synchronous>, transform_indices = @transform_2, window_bounds = array<i64: 1, 128>}, {transform_indices = @transform_3, window_bounds = array<i64: 8, 128>}]} {
    %c0 = arith.constant 0 : index
    %c0_0 = arith.constant 0 : index
    %0 = vector.load %arg1[%c0, %c0_0] : memref<8x256xf32, #tpu.memory_space<vmem>>, vector<8x256xf32>
    %c0_1 = arith.constant 0 : index
    %c0_2 = arith.constant 0 : index
    %1 = vector.load %arg2[%c0_1, %c0_2] : memref<256x128xf32, #tpu.memory_space<vmem>>, vector<256x128xf32>
    %cst = arith.constant dense<0.000000e+00> : vector<8x128xf32>
    %2 = tpu.matmul %0, %1, %cst {dimension_numbers = #tpu.dot_dimension_numbers<[1], [0], [0], [1], [0, 0, 1, 1], [], []>} : vector<8x256xf32>, vector<256x128xf32>, vector<8x128xf32> -> vector<8x128xf32>
    %c0_3 = arith.constant 0 : index
    %c0_4 = arith.constant 0 : index
    %3 = vector.load %arg3[%c0_3, %c0_4] : memref<1x128xf32, #tpu.memory_space<vmem>>, vector<1x128xf32>
    %4 = vector.broadcast %3 : vector<1x128xf32> to vector<8x128xf32>
    %5 = arith.addf %2, %4 : vector<8x128xf32>
    %c0_5 = arith.constant 0 : index
    %c0_6 = arith.constant 0 : index
    %6 = vector.load %arg4[%c0_5, %c0_6] : memref<8x128xf32, #tpu.memory_space<vmem>>, vector<8x128xf32>
    tpu.vector_store %arg4[%c0_5, %c0_6], %5 {strides = array<i32>} : memref<8x128xf32, #tpu.memory_space<vmem>>, vector<8x128xf32>,
    return
  }
  func.func @transform_0(%arg0: i32) -> (i32, i32) {
    %c0_i32 = arith.constant 0 : i32
    %c0_i32_0 = arith.constant 0 : i32
    return %arg0, %c0_i32 : i32, i32
  }
  func.func @transform_1(%arg0: i32) -> (i32, i32) {
    %c0_i32 = arith.constant 0 : i32
    %c0_i32_0 = arith.constant 0 : i32
    %c0_i32_1 = arith.constant 0 : i32
    return %c0_i32, %c0_i32_0 : i32, i32
  }
  func.func @transform_2(%arg0: i32) -> (i32, i32) {
    %c0_i32 = arith.constant 0 : i32
    %c0_i32_0 = arith.constant 0 : i32
    %c0_i32_1 = arith.constant 0 : i32
    return %c0_i32, %c0_i32_0 : i32, i32
  }
  func.func @transform_3(%arg0: i32) -> (i32, i32) {
    %c0_i32 = arith.constant 0 : i32
    %c0_i32_0 = arith.constant 0 : i32
    return %arg0, %c0_i32 : i32, i32
  }
}

</mosaic_0001>

<llo_original>
// kernel: tpu_custom_call.1
$region0: #{tpu_custom_call.1}
  #allocation0 [shape = 'u32[]', space=smem, size = 0x4, offset = 0x4, fixed_abs, tag = 'smem constant byte address 0x4 - core index']
  #allocation1 [shape = 'u32[144,128]{1,0:T(1,128)}', space=vmem, size = 0x12000, scoped, tag = 'internal scratch']
  %s0 = inlined_call_operand.hbm [shape: f32[16,256], index: 0, kind: input, shape index: {}]
  %s1 = inlined_call_operand.hbm [shape: f32[256,128], index: 1, kind: input, shape index: {}]
  %s2 = inlined_call_operand.vmem [shape: f32[1,128], index: 2, kind: input, shape index: {}]
  %s3 = inlined_call_operand.hbm [shape: f32[16,128], index: 3, kind: output, shape index: {}]
  %s4 = sld [smem:[#allocation0]]
  $region53: #{tpu_custom_call.1} parent=0
    _
  %s6 = ssub.s32 1, %s4
  %s7 = scalar_select 0, %s6, %s4
  $region1: #{tpu_custom_call.1} parent=0
    #allocation2 [shape = 'u8[16384]{0}', space=vmem, size = 0x4000, scoped, tag = 'input window, operand 0']
    #allocation3 [shape = 's32[2]{0}', space=sflag, size = 0x8, scoped, tag = 'scoped memory for tpu_custom_call.1']
    #allocation4 [shape = 's32[2]{0}', space=sflag, size = 0x8, scoped, tag = 'scoped memory for tpu_custom_call.1']
    #allocation5 [shape = 'u8[131072]{0}', space=vmem, size = 0x20000, scoped, tag = 'input window, operand 1, single buffered']
    #allocation6 [shape = 's32[1]{0}', space=sflag, size = 0x4, scoped, tag = 'scoped memory for tpu_custom_call.1']
    #allocation7 [shape = 'u8[8192]{0}', space=vmem, size = 0x2000, scoped, tag = 'output window, operand 0']
    %8 = vsyncpa [#allocation3], 0
    %s9 = scalar_lea.sflag [#allocation3], 1
    %10 = vsyncpa %s9, 0
    %11 = vsyncpa [#allocation6], 0
    %12 = vsyncpa [#allocation4], 0
    %s13 = scalar_lea.sflag [#allocation4], 1
    %14 = vsyncpa %s13, 0
    loop: start=0, step=1, limit=4
    $region2: #{tpu_custom_call.1} parent=1 // loop_pre_header
      _
    $region3: #{tpu_custom_call.1} parent=1 // loop_header
      %s16 = sphi 0, %s20
      %p17 = scmp.ge.s32.totalorder %s16, 4
      %s26 = sphi 0, %s28
      %s29 = sphi 0, %s26
      %s30 = sphi 0, %s29
      %s46 = sphi 0, %s30
      %s50 = sphi 0, %s50
      %s52 = sphi 0, %s50
      %s53 = sphi 0, %s52
      %s67 = sphi 0, %s53
      %s71 = sphi 0, %s71
      %s73 = sphi 0, %s71
      %s74 = sphi 0, %s73
      %s88 = sphi 0, %s74
      %s94 = sphi 0, %s96
      %s97 = sphi 0, %s94
      %s98 = sphi 0, %s97
      %s114 = sphi 0, %s98
    $region4: #{tpu_custom_call.1} parent=1 // loop_header_branch
      %19 = sbr.rel (%p17) target = $region8
    $region5: #{tpu_custom_call.1} parent=1 // loop_body
      %s21 = ssub.s32 %s16, 1
      %s22 = ssub.s32 %s16, 2
      %s23 = sadd.s32 %s16, 1
      %s24 = ssub.s32 %s16, %s23
      %p25 = scmp.eq.s32.totalorder %s24, 0
      %s27 = sadd.s32 %s26, 1
      %s28 = scalar_select %p25, %s26, %s27
      %p31 = pneg %p25
      %p32 = scmp.eq.s32.totalorder %s16, 1
      %p33 = por %p31, %p32
      %p34 = scmp.ne.s32.totalorder %s26, %s29
      %p35 = scmp.eq.s32.totalorder %s16, 0
      %p36 = por %p34, %p35
      %p37 = scmp.ne.s32.totalorder %s26, %s29
      %p38 = scmp.eq.s32.totalorder %s21, 1
      %p39 = por %p37, %p38
      %p40 = scmp.ne.s32.totalorder %s29, %s30
      %p41 = scmp.eq.s32.totalorder %s21, 0
      %p42 = por %p40, %p41
      %p43 = scmp.ne.s32.totalorder %s29, %s30
      %p44 = scmp.eq.s32.totalorder %s22, 1
      %p45 = por %p43, %p44
      %p47 = scmp.ne.s32.totalorder %s30, %s46
      %p48 = scmp.eq.s32.totalorder %s22, 0
      %p49 = por %p47, %p48
      %s51 = sadd.s32 %s50, 1
      %p54 = scmp.eq.s32.totalorder %s16, 1
      %p55 = scmp.ne.s32.totalorder %s50, %s52
      %p56 = scmp.eq.s32.totalorder %s16, 0
      %p57 = por %p55, %p56
      %p58 = scmp.ne.s32.totalorder %s50, %s52
      %p59 = scmp.eq.s32.totalorder %s21, 1
      %p60 = por %p58, %p59
      %p61 = scmp.ne.s32.totalorder %s52, %s53
      %p62 = scmp.eq.s32.totalorder %s21, 0
      %p63 = por %p61, %p62
      %p64 = scmp.ne.s32.totalorder %s52, %s53
      %p65 = scmp.eq.s32.totalorder %s22, 1
      %p66 = por %p64, %p65
      %p68 = scmp.ne.s32.totalorder %s53, %s67
      %p69 = scmp.eq.s32.totalorder %s22, 0
      %p70 = por %p68, %p69
      %s72 = sadd.s32 %s71, 1
      %p75 = scmp.eq.s32.totalorder %s16, 1
      %p76 = scmp.ne.s32.totalorder %s71, %s73
      %p77 = scmp.eq.s32.totalorder %s16, 0
      %p78 = por %p76, %p77
      %p79 = scmp.ne.s32.totalorder %s71, %s73
      %p80 = scmp.eq.s32.totalorder %s21, 1
      %p81 = por %p79, %p80
      %p82 = scmp.ne.s32.totalorder %s73, %s74
      %p83 = scmp.eq.s32.totalorder %s21, 0
      %p84 = por %p82, %p83
      %p85 = scmp.ne.s32.totalorder %s73, %s74
      %p86 = scmp.eq.s32.totalorder %s22, 1
      %p87 = por %p85, %p86
      %p89 = scmp.ne.s32.totalorder %s74, %s88
      %p90 = scmp.eq.s32.totalorder %s22, 0
      %p91 = por %p89, %p90
      %s92 = ssub.s32 %s16, %s23
      %p93 = scmp.eq.s32.totalorder %s92, 0
      %s95 = sadd.s32 %s94, 1
      %s96 = scalar_select %p93, %s94, %s95
      %p99 = pneg %p93
      %p100 = scmp.eq.s32.totalorder %s16, 1
      %p101 = por %p99, %p100
      %p102 = scmp.ne.s32.totalorder %s94, %s97
      %p103 = scmp.eq.s32.totalorder %s16, 0
      %p104 = por %p102, %p103
      %p105 = scmp.ne.s32.totalorder %s94, %s97
      %p106 = scmp.eq.s32.totalorder %s21, 1
      %p107 = por %p105, %p106
      %p108 = scmp.ne.s32.totalorder %s97, %s98
      %p109 = scmp.eq.s32.totalorder %s21, 0
      %p110 = por %p108, %p109
      %p111 = scmp.ne.s32.totalorder %s97, %s98
      %p112 = scmp.eq.s32.totalorder %s22, 1
      %p113 = por %p111, %p112
      %p115 = scmp.ne.s32.totalorder %s98, %s114
      %p116 = scmp.eq.s32.totalorder %s22, 0
      %p117 = por %p115, %p116
      %p118 = scmp.le.s32.totalorder 1, %s16
      %p119 = scmp.lt.s32.totalorder %s16, 3
      %p120 = pnand %p118, %p119
      %p121 = pneg %p120
      // Predicated region
      $region9: #{tpu_custom_call.1} parent=5 // pred_check
        _
      $region10: #{tpu_custom_call.1} parent=5 // pred_check_branch
        %123 = sbr.rel (%p120) target = $region12
      $region11: #{tpu_custom_call.1} parent=5 // pred_region
        %s124 = ssub.s32 %s16, 1
        // Predicated region
        $region13: #{tpu_custom_call.1} parent=11 // pred_check
          %p125 = pneg %p63
        $region14: #{tpu_custom_call.1} parent=11 // pred_check_branch
          %127 = sbr.rel (%p125) target = $region16
        $region15: #{tpu_custom_call.1} parent=11 // pred_region
          %s129 = ssub.s32 4096, 4096
          %130 = vsyncadd [#allocation6], %s129
          %s131 = sshll.u32 [#allocation5], 4
          %s132 = int_to_ptr.vmem [resolvable:$true] %s131
          %137 = dma.hbm_to_vmem [thread:$0]  %s1, 4096, %s132, [#allocation6], 128, 128, 8
        $region16: #{tpu_custom_call.1} parent=11 // pred_fallthru
          _
        // Predicated region
        $region17: #{tpu_custom_call.1} parent=11 // pred_check
          %p138 = pneg %p84
        $region18: #{tpu_custom_call.1} parent=11 // pred_check_branch
          %140 = sbr.rel (%p138) target = $region20
        $region19: #{tpu_custom_call.1} parent=11 // pred_region
          _
        $region20: #{tpu_custom_call.1} parent=11 // pred_fallthru
          _
      $region12: #{tpu_custom_call.1} parent=5 // pred_fallthru
        _
      %p141 = scmp.lt.s32.totalorder %s16, 2
      // Predicated region
      $region21: #{tpu_custom_call.1} parent=5 // pred_check
        %p142 = pneg %p141
      $region22: #{tpu_custom_call.1} parent=5 // pred_check_branch
        %144 = sbr.rel (%p142) target = $region24
      $region23: #{tpu_custom_call.1} parent=5 // pred_region
        // Predicated region
        $region25: #{tpu_custom_call.1} parent=23 // pred_check
          %p145 = pneg %p36
        $region26: #{tpu_custom_call.1} parent=23 // pred_check_branch
          %147 = sbr.rel (%p145) target = $region28
        $region27: #{tpu_custom_call.1} parent=23 // pred_region
          %s148 = sand.u32 %s26, 1
          %s149 = scalar_lea.sflag [#allocation3], %s148
          %s150 = sand.u32 %s26, 1
          %s151 = smul.addr %s150, 16
          %s152 = scalar_lea.vmem [#allocation2], %s151
          %s154 = ssub.s32 256, 256
          %155 = vsyncadd %s149, %s154
          %s156 = smul.addr %s16, 2
          %s157 = smul.addr %s156, 128
          %s158 = scalar_lea.hbm %s0, %s157
          %s160 = sshll.u32 %s152, 4
          %s161 = int_to_ptr.vmem [resolvable:$true] %s160
          %163 = dma.hbm_to_vmem [thread:$0]  %s158, 256, %s161, %s149
        $region28: #{tpu_custom_call.1} parent=23 // pred_fallthru
          _
      $region24: #{tpu_custom_call.1} parent=5 // pred_fallthru
        _
      %p164 = scmp.le.s32.totalorder 1, %s16
      %p165 = scmp.lt.s32.totalorder %s16, 3
      %p166 = pnand %p164, %p165
      %p167 = pneg %p166
      // Predicated region
      $region29: #{tpu_custom_call.1} parent=5 // pred_check
        _
      $region30: #{tpu_custom_call.1} parent=5 // pred_check_branch
        %169 = sbr.rel (%p166) target = $region32
      $region31: #{tpu_custom_call.1} parent=5 // pred_region
        %s170 = ssub.s32 %s16, 1
        %s171 = sand.u32 %s29, 1
        %s172 = scalar_lea.sflag [#allocation3], %s171
        %s173 = sand.u32 %s29, 1
        %s174 = smul.addr %s173, 16
        %s175 = scalar_lea.vmem [#allocation2], %s174
        // Predicated region
        $region33: #{tpu_custom_call.1} parent=31 // pred_check
          %p176 = pneg %p42
        $region34: #{tpu_custom_call.1} parent=31 // pred_check_branch
          %178 = sbr.rel (%p176) target = $region36
        $region35: #{tpu_custom_call.1} parent=31 // pred_region
          %179 = dma.done %s172, 256
        $region36: #{tpu_custom_call.1} parent=31 // pred_fallthru
          _
        // Predicated region
        $region37: #{tpu_custom_call.1} parent=31 // pred_check
          %p180 = pneg %p63
        $region38: #{tpu_custom_call.1} parent=31 // pred_check_branch
          %182 = sbr.rel (%p180) target = $region40
        $region39: #{tpu_custom_call.1} parent=31 // pred_region
          %183 = dma.done [#allocation6], 4096
        $region40: #{tpu_custom_call.1} parent=31 // pred_fallthru
          _
        %s184 = sand.u32 %s29, 1
        %s185 = scalar_lea.sflag [#allocation3], %s184
        %s186 = sand.u32 %s29, 1
        %s187 = smul.addr %s186, 16
        %s188 = scalar_lea.vmem [#allocation2], %s187
        %p189 = pneg %p42
        %p190 = pneg %p39
        %p191 = pneg %p63
        %p192 = pneg %p60
        %p193 = pneg %p84
        %p194 = pneg %p81
        %p195 = pneg %p110
        %p196 = pneg %p107
        %s197 = sand.u32 %s97, 1
        %s198 = scalar_lea.sflag [#allocation4], %s197
        %s199 = sand.u32 %s97, 1
        %s200 = smul.addr %s199, 8
        %s201 = scalar_lea.vmem [#allocation7], %s200
        %v202 = vld [vmem:[%s175] sm:$0xff]
        %v203 = vld [vmem:[%s175 + $0x8] sm:$0xff]
        %v204 = vld [vmem:[#allocation5] sm:$0xff]
        %v205 = vld [vmem:[#allocation5 + $0x8] sm:$0xff]
        %v206 = vld [vmem:[#allocation5 + $0x10] sm:$0xff]
        %v207 = vld [vmem:[#allocation5 + $0x18] sm:$0xff]
        %v208 = vld [vmem:[#allocation5 + $0x20] sm:$0xff]
        %v209 = vld [vmem:[#allocation5 + $0x28] sm:$0xff]
        %v210 = vld [vmem:[#allocation5 + $0x30] sm:$0xff]
        %v211 = vld [vmem:[#allocation5 + $0x38] sm:$0xff]
        %v212 = vld [vmem:[#allocation5 + $0x40] sm:$0xff]
        %v213 = vld [vmem:[#allocation5 + $0x48] sm:$0xff]
        %v214 = vld [vmem:[#allocation5 + $0x50] sm:$0xff]
        %v215 = vld [vmem:[#allocation5 + $0x58] sm:$0xff]
        %v216 = vld [vmem:[#allocation5 + $0x60] sm:$0xff]
        %v217 = vld [vmem:[#allocation5 + $0x68] sm:$0xff]
        %v218 = vld [vmem:[#allocation5 + $0x70] sm:$0xff]
        %v219 = vld [vmem:[#allocation5 + $0x78] sm:$0xff]
        %v220 = vld [vmem:[#allocation5 + $0x80] sm:$0xff]
        %v221 = vld [vmem:[#allocation5 + $0x88] sm:$0xff]
        %v222 = vld [vmem:[#allocation5 + $0x90] sm:$0xff]
        %v223 = vld [vmem:[#allocation5 + $0x98] sm:$0xff]
        %v224 = vld [vmem:[#allocation5 + $0xa0] sm:$0xff]
        %v225 = vld [vmem:[#allocation5 + $0xa8] sm:$0xff]
        %v226 = vld [vmem:[#allocation5 + $0xb0] sm:$0xff]
        %v227 = vld [vmem:[#allocation5 + $0xb8] sm:$0xff]
        %v228 = vld [vmem:[#allocation5 + $0xc0] sm:$0xff]
        %v229 = vld [vmem:[#allocation5 + $0xc8] sm:$0xff]
        %v230 = vld [vmem:[#allocation5 + $0xd0] sm:$0xff]
        %v231 = vld [vmem:[#allocation5 + $0xd8] sm:$0xff]
        %v232 = vld [vmem:[#allocation5 + $0xe0] sm:$0xff]
        %v233 = vld [vmem:[#allocation5 + $0xe8] sm:$0xff]
        %v234 = vld [vmem:[#allocation5 + $0xf0] sm:$0xff]
        %v235 = vld [vmem:[#allocation5 + $0xf8] sm:$0xff]
        %v236 = vld [vmem:[%s2] sm:$0x1]
        %v238 = vlaneseq
        %v239 = vshrl.u32 %v238, 7
        %v240 = vsub.s32 0, %v239
        %v241 = vrot.slane %v236, %v240
        %243 = vmatprep.subr.mxu0 0.0
        %244 = vmatpush1.msra.mxu0 %v204
        %245 = vmatprep.subr.mxu0 0.0
        %246 = vmatpush1.msra.mxu0 %v205
        %247 = vmatprep.subr.mxu0 0.0
        %248 = vmatpush1.msra.mxu0 %v206
        %249 = vmatprep.subr.mxu0 0.0
        %250 = vmatpush1.msra.mxu0 %v207
        %251 = vmatprep.subr.mxu0 0.0
        %252 = vmatpush1.msra.mxu0 %v208
        %253 = vmatprep.subr.mxu0 0.0
        %254 = vmatpush1.msra.mxu0 %v209
        %255 = vmatprep.subr.mxu0 0.0
        %256 = vmatpush1.msra.mxu0 %v210
        %257 = vmatprep.subr.mxu0 0.0
        %258 = vmatpush1.msra.mxu0 %v211
        %259 = vmatprep.subr.mxu0 0.0
        %260 = vmatpush1.msra.mxu0 %v212
        %261 = vmatprep.subr.mxu0 0.0
        %262 = vmatpush1.msra.mxu0 %v213
        %263 = vmatprep.subr.mxu0 0.0
        %264 = vmatpush1.msra.mxu0 %v214
        %265 = vmatprep.subr.mxu0 0.0
        %266 = vmatpush1.msra.mxu0 %v215
        %267 = vmatprep.subr.mxu0 0.0
        %268 = vmatpush1.msra.mxu0 %v216
        %269 = vmatprep.subr.mxu0 0.0
        %270 = vmatpush1.msra.mxu0 %v217
        %271 = vmatprep.subr.mxu0 0.0
        %272 = vmatpush1.msra.mxu0 %v218
        %273 = vmatprep.subr.mxu0 0.0
        %274 = vmatpush1.msra.mxu0 %v219
        %275 = vmatprep.subr.mxu0 0.0
        %276 = vmatpush1.msra.mxu0 %v220
        %277 = vmatprep.subr.mxu0 0.0
        %278 = vmatpush1.msra.mxu0 %v221
        %279 = vmatprep.subr.mxu0 0.0
        %280 = vmatpush1.msra.mxu0 %v222
        %281 = vmatprep.subr.mxu0 0.0
        %282 = vmatpush1.msra.mxu0 %v223
        %283 = vmatprep.subr.mxu0 0.0
        %284 = vmatpush1.msra.mxu0 %v224
        %285 = vmatprep.subr.mxu0 0.0
        %286 = vmatpush1.msra.mxu0 %v225
        %287 = vmatprep.subr.mxu0 0.0
        %288 = vmatpush1.msra.mxu0 %v226
        %289 = vmatprep.subr.mxu0 0.0
        %290 = vmatpush1.msra.mxu0 %v227
        %291 = vmatprep.subr.mxu0 0.0
        %292 = vmatpush1.msra.mxu0 %v228
        %293 = vmatprep.subr.mxu0 0.0
        %294 = vmatpush1.msra.mxu0 %v229
        %295 = vmatprep.subr.mxu0 0.0
        %296 = vmatpush1.msra.mxu0 %v230
        %297 = vmatprep.subr.mxu0 0.0
        %298 = vmatpush1.msra.mxu0 %v231
        %299 = vmatprep.subr.mxu0 0.0
        %300 = vmatpush1.msra.mxu0 %v232
        %301 = vmatprep.subr.mxu0 0.0
        %302 = vmatpush1.msra.mxu0 %v233
        %303 = vmatprep.subr.mxu0 0.0
        %304 = vmatpush1.msra.mxu0 %v234
        %305 = vmatprep.subr.mxu0 0.0
        %306 = vmatpush1.msra.mxu0 %v235
        %307 = vmatprep.mubr.f32.mxu0 %v203
        %308 = vmatmul.mubr.f32.gmra.mrb[0].mxu0 %v202
        %v309 = vpop.f32.mrb[0].mxu0
        %v310 = vadd.f32 %v241, %v309
        %v311 = vpop.f32.mrb[0].mxu0
        %312 = vdwg.mxu0
        %313 = vst [vmem:[%s201] sm:$0xff] %v310
        %s314 = sand.u32 %s97, 1
        %s315 = scalar_lea.sflag [#allocation4], %s314
        %s316 = sand.u32 %s97, 1
        %s317 = smul.addr %s316, 8
        %s318 = scalar_lea.vmem [#allocation7], %s317
        // Predicated region
        $region41: #{tpu_custom_call.1} parent=31 // pred_check
          %p319 = pneg %p107
        $region42: #{tpu_custom_call.1} parent=31 // pred_check_branch
          %321 = sbr.rel (%p319) target = $region44
        $region43: #{tpu_custom_call.1} parent=31 // pred_region
          %s323 = ssub.s32 128, 128
          %324 = vsyncadd %s315, %s323
          %s325 = smul.addr %s21, 128
          %s326 = scalar_lea.hbm %s3, %s325
          %s328 = sshll.u32 %s318, 4
          %s329 = int_to_ptr.vmem [resolvable:$true] %s328
          %331 = dma.vmem_to_hbm [thread:$0]  %s329, 128, %s326, %s315
        $region44: #{tpu_custom_call.1} parent=31 // pred_fallthru
          _
      $region32: #{tpu_custom_call.1} parent=5 // pred_fallthru
        _
      %p332 = scmp.le.s32.totalorder 2, %s16
      // Predicated region
      $region45: #{tpu_custom_call.1} parent=5 // pred_check
        %p333 = pneg %p332
      $region46: #{tpu_custom_call.1} parent=5 // pred_check_branch
        %335 = sbr.rel (%p333) target = $region48
      $region47: #{tpu_custom_call.1} parent=5 // pred_region
        %s336 = ssub.s32 %s16, 2
        // Predicated region
        $region49: #{tpu_custom_call.1} parent=47 // pred_check
          %p337 = pneg %p113
        $region50: #{tpu_custom_call.1} parent=47 // pred_check_branch
          %339 = sbr.rel (%p337) target = $region52
        $region51: #{tpu_custom_call.1} parent=47 // pred_region
          %s340 = sand.u32 %s98, 1
          %s341 = scalar_lea.sflag [#allocation4], %s340
          %s342 = sand.u32 %s98, 1
          %s343 = smul.addr %s342, 8
          %s344 = scalar_lea.vmem [#allocation7], %s343
          %345 = dma.done %s341, 128
        $region52: #{tpu_custom_call.1} parent=47 // pred_fallthru
          _
      $region48: #{tpu_custom_call.1} parent=5 // pred_fallthru
        _
    $region6: #{tpu_custom_call.1} parent=1 // loop_footer
      %s20 = sadd.s32 1, %s16
    $region7: #{tpu_custom_call.1} parent=1 // loop_footer_branch
      %15 = sbr.rel target = $region3
    $region8: #{tpu_custom_call.1} parent=1 // loop_exit
      _
    %346 = vsyncpa [#allocation3], 1
    %s347 = scalar_lea.sflag [#allocation3], 1
    %348 = vsyncpa %s347, 1
    %349 = vsyncpa [#allocation6], 1
    %350 = vsyncpa [#allocation4], 1
    %s351 = scalar_lea.sflag [#allocation4], 1
    %352 = vsyncpa %s351, 1

</llo_original>
